<compile_context>
chip_gen: v5e
topology: v5e:2x2
jax: 0.10.0
libtpu: 0.0.40
codegen_flags: <defaults>
</compile_context>

<pallas_src>
import functools

import jax
import jax.numpy as jnp
from jax.experimental import pallas as pl
from jax.experimental.pallas import tpu as pltpu


# --------------------------------------------------------------------------------------
# Pallas kernel: fused conv (accumulating matmuls) + bias + ReLU + masked BN partials
# --------------------------------------------------------------------------------------
def _conv_relu_stats_kernel(e_ref, o_ref, w_ref, b_ref, y_ref, sum_ref, ssq_ref,
                            *, taps, wo):
    """One (channel-block, image) tile.

    e_ref / o_ref : (R_pad, K) even / odd padded-row planes for one image, horizontal taps folded
                    into the channel (contraction) dim.  Output pixel (r, c) -- flattened as
                    m = r*(Wo+1) + c -- reads contiguous row slices at the static offsets in `taps`.
    w_ref         : (n_taps, K, LB) packed conv taps, b_ref: (1, LB) bias (f32).
    y_ref         : (Mp, LB) conv+ReLU output; sum_ref / ssq_ref: (1, LB) per-image BN partials.
    taps          : static tuple of (plane_index, row_offset); plane 0 = even, 1 = odd.
    """
    mp, _ = y_ref.shape
    planes = (e_ref, o_ref)

    # First tap initialises the accumulator together with the bias (no zero-init sweep,
    # no separate bias-add pass).
    p0, off0 = taps[0]
    acc = jnp.dot(planes[p0][pl.ds(off0, mp), :], w_ref[0],
                  preferred_element_type=jnp.float32) + b_ref[...]
    for wi in range(1, len(taps)):
        p, off = taps[wi]
        acc = acc + jnp.dot(planes[p][pl.ds(off, mp), :], w_ref[wi],
                            preferred_element_type=jnp.float32)

    y = jnp.maximum(acc, 0.0)                       # ReLU
    y_ref[...] = y

    # In-kernel validity mask (VPU iota/compare) -- the c == Wo column of each flattened output
    # row is junk and is excluded from the BN statistics (and sliced off in the epilogue).
    col = jax.lax.broadcasted_iota(jnp.int32, (mp, 1), 0) % (wo + 1)
    yv = jnp.where(col == wo, 0.0, y)
    sum_ref[...] = jnp.sum(yv, axis=0, keepdims=True)
    ssq_ref[...] = jnp.sum(yv * yv, axis=0, keepdims=True)


# --------------------------------------------------------------------------------------
# Host-side wrapper
# --------------------------------------------------------------------------------------
def _round_up(x, m):
    return -(-x // m) * m


@functools.partial(jax.jit,
                   static_argnames=("eps", "matmul_dtype", "k_pack", "lane_block"))
def unet_down_forward(x_nchw, conv_w, conv_b, gamma, beta, eps=0.8,
                      matmul_dtype=jnp.bfloat16, k_pack=None, lane_block=None):
    """Forward pass of UNetDown.  x_nchw: (N, Cin, H, W) -> (N, Cout, Ho, Wo)."""
    n, cin, h, w = x_nchw.shape
    cout = conv_w.shape[0]
    ho = (h - 1) // 2 + 1            # Conv2d(k=3, s=2, p=1)
    wo = (w - 1) // 2 + 1
    mp = ho * (wo + 1)               # flattened output rows per image (incl. junk column c == Wo)

    if k_pack is None:
        k_pack = (2 * cin) < 64      # small-Cin layers: fold all kw taps into the contraction dim
    if lane_block is None:
        lane_block = 256 if cout >= 256 else 128   # fill the 256-wide MXU N dim on v6e/v7x
    cop = _round_up(cout, lane_block)
    n_cblk = cop // lane_block

    # ---- space-to-depth layout prep (reshape/pad/concat only; cast early so the prep pass and
    #      the kernel's activation reads are already in matmul_dtype) ----------------------------
    hp = 2 * (ho + 1)
    wp = 2 * (wo + 1)
    x_nhwc = jnp.transpose(x_nchw, (0, 2, 3, 1)).astype(matmul_dtype)
    xp = jnp.pad(x_nhwc, ((0, 0), (1, hp - h - 1), (1, wp - w - 1), (0, 0)))
    xr = xp.reshape(n, ho + 1, 2, wo + 1, 2 * cin)      # (N, row-pair, parity, col-pair, 2*Cin)
    r = (ho + 1) * (wo + 1)
    e2 = xr[:, :, 0].reshape(n, r, 2 * cin)             # even padded rows
    o2 = xr[:, :, 1].reshape(n, r, 2 * cin)             # odd padded rows

    wt = jnp.transpose(conv_w, (2, 3, 1, 0)).astype(matmul_dtype)   # (kh, kw, Cin, Cout)
    zero = jnp.zeros((cin, cout), matmul_dtype)

    if k_pack:
        # K = 4*Cin: the three kw taps of one kh row share one contraction -> 3 matmuls,
        # no +1 row offsets (costs 2x activation bytes, worth it when 2*Cin << 128).
        kdim = 4 * cin
        r_pad = _round_up(r, 8)
        e2p = jnp.pad(e2, ((0, 0), (0, r_pad + 1 - r), (0, 0)))
        o2p = jnp.pad(o2, ((0, 0), (0, r_pad + 1 - r), (0, 0)))
        e_in = jnp.concatenate([e2p[:, :r_pad], e2p[:, 1:r_pad + 1]], axis=-1)
        o_in = jnp.concatenate([o2p[:, :r_pad], o2p[:, 1:r_pad + 1]], axis=-1)
        w_list = [jnp.concatenate([wt[kh, 0], wt[kh, 1], wt[kh, 2], zero], axis=0)
                  for kh in range(3)]
        taps = ((0, 0),           # kh=0: even row 2r
                (1, 0),           # kh=1: odd  row 2r+1
                (0, wo + 1))      # kh=2: even row 2r+2
    else:
        # K = 2*Cin: 6 matmuls, activation planes are exactly 1x the input bytes.
        kdim = 2 * cin
        r_pad = _round_up(r + 1, 8)   # +1: last junk row reads one row past the end of E
        e_in = jnp.pad(e2, ((0, 0), (0, r_pad - r), (0, 0)))
        o_in = jnp.pad(o2, ((0, 0), (0, r_pad - r), (0, 0)))
        w_list = [
            jnp.concatenate([wt[0, 0], wt[0, 1]], axis=0),   # E, +0
            jnp.concatenate([wt[0, 2], zero], axis=0),       # E, +1
            jnp.concatenate([wt[1, 0], wt[1, 1]], axis=0),   # O, +0
            jnp.concatenate([wt[1, 2], zero], axis=0),       # O, +1
            jnp.concatenate([wt[2, 0], wt[2, 1]], axis=0),   # E, +Wo+1
            jnp.concatenate([wt[2, 2], zero], axis=0),       # E, +Wo+2
        ]
        taps = ((0, 0), (0, 1), (1, 0), (1, 1), (0, wo + 1), (0, wo + 2))

    n_taps = len(taps)
    w_in = jnp.pad(jnp.stack(w_list, axis=0), ((0, 0), (0, 0), (0, cop - cout)))
    b2 = jnp.pad(conv_b.astype(jnp.float32), (0, cop - cout)).reshape(1, cop)

    # ---- VMEM budget from the real (double-buffered) block sizes -------------------------------
    itm = jnp.dtype(matmul_dtype).itemsize
    kd_lanes = _round_up(kdim, 128)                # E/O last dim lane-pads to 128 in VMEM
    est = (2 * 2 * r_pad * kd_lanes * itm          # E + O blocks, double-buffered
           + 2 * n_taps * _round_up(kdim, 16) * lane_block * itm   # weights, double-buffered
           + 2 * 1 * lane_block * 4                                # bias
           + (2 + 4) * mp * lane_block * 4                         # y out (x2) + f32 temporaries
           + 2 * 2 * lane_block * 4)                               # stats outputs
    vmem_limit = int(min(max(est * 5 // 4, 32 * 2 ** 20), 64 * 2 ** 20))

    kernel = functools.partial(_conv_relu_stats_kernel, taps=taps, wo=wo)

    # ---- Pallas kernel: conv + bias + ReLU + per-image BN partial stats ------------------------
    # Grid = (channel block, image): the weight block index is constant across the inner (image)
    # axis, so weights are DMA'd once per channel block, not once per grid step.
    y, psum, pssq = pl.pallas_call(
        kernel,
        grid=(n_cblk, n),
        in_specs=[
            pl.BlockSpec((None, r_pad, kdim), lambda cb, i: (i, 0, 0)),        # E plane
            pl.BlockSpec((None, r_pad, kdim), lambda cb, i: (i, 0, 0)),        # O plane
            pl.BlockSpec((n_taps, kdim, lane_block), lambda cb, i: (0, 0, cb)),  # packed taps
            pl.BlockSpec((1, lane_block), lambda cb, i: (0, cb)),              # bias
        ],
        out_specs=(
            pl.BlockSpec((None, mp, lane_block), lambda cb, i: (i, 0, cb)),    # conv+ReLU output
            pl.BlockSpec((None, 1, lane_block), lambda cb, i: (i, 0, cb)),     # per-image sum
            pl.BlockSpec((None, 1, lane_block), lambda cb, i: (i, 0, cb)),     # per-image sum-sq
        ),
        out_shape=(
            jax.ShapeDtypeStruct((n, mp, cop), jnp.float32),
            jax.ShapeDtypeStruct((n, 1, cop), jnp.float32),
            jax.ShapeDtypeStruct((n, 1, cop), jnp.float32),
        ),
        compiler_params=pltpu.CompilerParams(
            dimension_semantics=("parallel", "parallel"),
            vmem_limit_bytes=vmem_limit),
    )(e_in, o_in, w_in, b2)

    # ---- Epilogue: BatchNorm2d (training-mode) statistics + fused affine/slice/transpose -------
    count = jnp.float32(n * ho * wo)
    csum = jnp.sum(psum[:, 0, :cout], axis=0)
    cssq = jnp.sum(pssq[:, 0, :cout], axis=0)
    mean = csum / count
    # E[x^2] - E[x]^2; clamp tiny negative cancellation noise (eps=0.8 dominates regardless).
    var = jnp.maximum(cssq / count - mean * mean, 0.0)
    inv_std = jax.lax.rsqrt(var + jnp.float32(eps))
    scale = gamma.astype(jnp.float32) * inv_std
    shift = beta.astype(jnp.float32) - mean * scale

    # Per-channel affine + junk-column slice + NCHW transpose: fused by XLA into one pass.
    y_nhwc = y.reshape(n, ho, wo + 1, cop)[:, :, :wo, :cout] * scale + shift
    return jnp.transpose(y_nhwc, (0, 3, 1, 2))


# --------------------------------------------------------------------------------------
# Reference (pure JAX) for a sanity check
# --------------------------------------------------------------------------------------
def _reference(x_nchw, conv_w, conv_b, gamma, beta, eps=0.8):
    y = jax.lax.conv_general_dilated(
        x_nchw.astype(jnp.float32), conv_w.astype(jnp.float32),
        window_strides=(2, 2), padding=((1, 1), (1, 1)),
        dimension_numbers=("NCHW", "OIHW", "NCHW"),
    ) + conv_b.reshape(1, -1, 1, 1)
    y = jnp.maximum(y, 0.0)
    mean = jnp.mean(y, axis=(0, 2, 3), keepdims=True)
    var = jnp.mean((y - mean) ** 2, axis=(0, 2, 3), keepdims=True)
    y = (y - mean) / jnp.sqrt(var + eps)
    return y * gamma.reshape(1, -1, 1, 1) + beta.reshape(1, -1, 1, 1)


if __name__ == "__main__":
    # Small shapes consistent with UNetDown: N=2, Cin=4, H=W=16, Cout=8.
    key = jax.random.PRNGKey(0)
    k_x, k_w, k_b = jax.random.split(key, 3)

    N, CIN, H, W = 2, 4, 16, 16
    COUT = 8

    x = jax.random.normal(k_x, (N, CIN, H, W), dtype=jnp.float32)

    # Deterministic parameter init (Conv2d weight/bias; BatchNorm gamma=1, beta=0).
    fan_in = CIN * 3 * 3
    bound = 1.0 / jnp.sqrt(jnp.float32(fan_in))
    conv_w = jax.random.uniform(k_w, (COUT, CIN, 3, 3), jnp.float32, -bound, bound)
    conv_b = jax.random.uniform(k_b, (COUT,), jnp.float32, -bound, bound)
    gamma = jnp.ones((COUT,), jnp.float32)
    beta = jnp.zeros((COUT,), jnp.float32)

    ref = _reference(x, conv_w, conv_b, gamma, beta)

    # f32 MXU path (both tap schedules): exact parity against the f32 reference.
    for kp in (True, False):
        out = unet_down_forward(x, conv_w, conv_b, gamma, beta,
                                matmul_dtype=jnp.float32, k_pack=kp)
        out = jax.block_until_ready(out)
        assert out.shape == (N, COUT, H // 2, W // 2), out.shape
        err = float(jnp.max(jnp.abs(out - ref)))
        assert err < 5e-4, (kp, err)

    # Default path: bf16 MXU inputs with f32 accumulation -> dtype-gated (looser) tolerance.
    out_bf16 = jax.block_until_ready(unet_down_forward(x, conv_w, conv_b, gamma, beta))
    assert out_bf16.shape == (N, COUT, H // 2, W // 2), out_bf16.shape
    err_bf16 = float(jnp.max(jnp.abs(out_bf16 - ref)))
    assert err_bf16 < 5e-2, err_bf16

    print("KERNEL_OK")
</pallas_src>

<mosaic_0001>
module attributes {stable_mosaic.version = 11 : i64} {
  func.func @_conv_relu_stats_kernel(%arg0: i32, %arg1: i32, %arg2: memref<1x88x16xf32, #tpu.memory_space<vmem>>, %arg3: memref<1x88x16xf32, #tpu.memory_space<vmem>>, %arg4: memref<3x16x128xf32, #tpu.memory_space<vmem>>, %arg5: memref<1x128xf32, #tpu.memory_space<vmem>>, %arg6: memref<1x72x128xf32, #tpu.memory_space<vmem>>, %arg7: memref<1x1x128xf32, #tpu.memory_space<vmem>>, %arg8: memref<1x1x128xf32, #tpu.memory_space<vmem>>) attributes {dimension_semantics = [#tpu.dimension_semantics<parallel>, #tpu.dimension_semantics<parallel>], iteration_bounds = array<i64: 1, 2>, scalar_prefetch = 0 : i64, scratch_operands = 0 : i64, tpu.core_type = #tpu.core_type<tc>, window_params = [{transform_indices = @transform_0, window_bounds = array<i64: 1, 88, 16>}, {transform_indices = @transform_1, window_bounds = array<i64: 1, 88, 16>}, {transform_indices = @transform_2, window_bounds = array<i64: 3, 16, 128>}, {transform_indices = @transform_3, window_bounds = array<i64: 1, 128>}, {transform_indices = @transform_4, window_bounds = array<i64: 1, 72, 128>}, {transform_indices = @transform_5, window_bounds = array<i64: 1, 1, 128>}, {transform_indices = @transform_6, window_bounds = array<i64: 1, 1, 128>}]} {
    %c0 = arith.constant 0 : index
    %c0_0 = arith.constant 0 : index
    %c0_1 = arith.constant 0 : index
    %0 = vector.load %arg2[%c0, %c0_0, %c0_1] : memref<1x88x16xf32, #tpu.memory_space<vmem>>, vector<1x72x16xf32>
    %1 = vector.shape_cast %0 : vector<1x72x16xf32> to vector<72x16xf32>
    %c0_2 = arith.constant 0 : index
    %c0_3 = arith.constant 0 : index
    %c0_4 = arith.constant 0 : index
    %2 = vector.load %arg4[%c0_2, %c0_3, %c0_4] : memref<3x16x128xf32, #tpu.memory_space<vmem>>, vector<1x16x128xf32>
    %3 = vector.shape_cast %2 : vector<1x16x128xf32> to vector<16x128xf32>
    %cst = arith.constant dense<0.000000e+00> : vector<72x128xf32>
    %4 = tpu.matmul %1, %3, %cst {dimension_numbers = #tpu.dot_dimension_numbers<[1], [0], [0], [1], [0, 0, 1, 1], [], []>} : vector<72x16xf32>, vector<16x128xf32>, vector<72x128xf32> -> vector<72x128xf32>
    %c0_5 = arith.constant 0 : index
    %c0_6 = arith.constant 0 : index
    %5 = vector.load %arg5[%c0_5, %c0_6] : memref<1x128xf32, #tpu.memory_space<vmem>>, vector<1x128xf32>
    %6 = vector.broadcast %5 : vector<1x128xf32> to vector<72x128xf32>
    %7 = arith.addf %4, %6 : vector<72x128xf32>
    %c0_7 = arith.constant 0 : index
    %c0_8 = arith.constant 0 : index
    %c0_9 = arith.constant 0 : index
    %8 = vector.load %arg3[%c0_7, %c0_8, %c0_9] : memref<1x88x16xf32, #tpu.memory_space<vmem>>, vector<1x72x16xf32>
    %9 = vector.shape_cast %8 : vector<1x72x16xf32> to vector<72x16xf32>
    %c1 = arith.constant 1 : index
    %c0_10 = arith.constant 0 : index
    %c0_11 = arith.constant 0 : index
    %10 = vector.load %arg4[%c1, %c0_10, %c0_11] : memref<3x16x128xf32, #tpu.memory_space<vmem>>, vector<1x16x128xf32>
    %11 = vector.shape_cast %10 : vector<1x16x128xf32> to vector<16x128xf32>
    %cst_12 = arith.constant dense<0.000000e+00> : vector<72x128xf32>
    %12 = tpu.matmul %9, %11, %cst_12 {dimension_numbers = #tpu.dot_dimension_numbers<[1], [0], [0], [1], [0, 0, 1, 1], [], []>} : vector<72x16xf32>, vector<16x128xf32>, vector<72x128xf32> -> vector<72x128xf32>
    %13 = arith.addf %7, %12 : vector<72x128xf32>
    %c0_13 = arith.constant 0 : index
    %c9 = arith.constant 9 : index
    %c0_14 = arith.constant 0 : index
    %14 = vector.load %arg2[%c0_13, %c9, %c0_14] : memref<1x88x16xf32, #tpu.memory_space<vmem>>, vector<1x72x16xf32>
    %15 = vector.shape_cast %14 : vector<1x72x16xf32> to vector<72x16xf32>
    %c2 = arith.constant 2 : index
    %c0_15 = arith.constant 0 : index
    %c0_16 = arith.constant 0 : index
    %16 = vector.load %arg4[%c2, %c0_15, %c0_16] : memref<3x16x128xf32, #tpu.memory_space<vmem>>, vector<1x16x128xf32>
    %17 = vector.shape_cast %16 : vector<1x16x128xf32> to vector<16x128xf32>
    %cst_17 = arith.constant dense<0.000000e+00> : vector<72x128xf32>
    %18 = tpu.matmul %15, %17, %cst_17 {dimension_numbers = #tpu.dot_dimension_numbers<[1], [0], [0], [1], [0, 0, 1, 1], [], []>} : vector<72x16xf32>, vector<16x128xf32>, vector<72x128xf32> -> vector<72x128xf32>
    %19 = arith.addf %13, %18 : vector<72x128xf32>
    %cst_18 = arith.constant 0.000000e+00 : f32
    %20 = vector.broadcast %cst_18 : f32 to vector<72x128xf32>
    %21 = arith.maximumf %19, %20 : vector<72x128xf32>
    %c0_19 = arith.constant 0 : index
    %c0_20 = arith.constant 0 : index
    %c0_21 = arith.constant 0 : index
    %22 = vector.load %arg6[%c0_19, %c0_20, %c0_21] : memref<1x72x128xf32, #tpu.memory_space<vmem>>, vector<1x72x128xf32>
    %23 = vector.shape_cast %22 : vector<1x72x128xf32> to vector<72x128xf32>
    %24 = vector.shape_cast %21 : vector<72x128xf32> to vector<1x72x128xf32>
    tpu.vector_store %arg6[%c0_19, %c0_20, %c0_21], %24 {strides = array<i32>} : memref<1x72x128xf32, #tpu.memory_space<vmem>>, vector<1x72x128xf32>,
    %25 = tpu.iota {dimensions = array<i32: 0>} : vector<72x1xi32>
    %c9_i32 = arith.constant 9 : i32
    %c0_i32 = arith.constant 0 : i32
    %26 = arith.cmpi eq, %c9_i32, %c0_i32 : i32
    %c1_i32 = arith.constant 1 : i32
    %27 = arith.select %26, %c1_i32, %c9_i32 : i32
    %28 = vector.broadcast %27 : i32 to vector<72x1xi32>
    %29 = arith.remsi %25, %28 : vector<72x1xi32>
    %c0_i32_22 = arith.constant 0 : i32
    %30 = vector.broadcast %c0_i32_22 : i32 to vector<72x1xi32>
    %31 = arith.cmpi ne, %29, %30 : vector<72x1xi32>
    %c0_i32_23 = arith.constant 0 : i32
    %32 = vector.broadcast %c0_i32_23 : i32 to vector<72x1xi32>
    %33 = arith.cmpi slt, %29, %32 : vector<72x1xi32>
    %c0_i32_24 = arith.constant 0 : i32
    %34 = arith.cmpi slt, %27, %c0_i32_24 : i32
    %35 = vector.broadcast %34 : i1 to vector<72x1xi1>
    %36 = vector.broadcast %35 : vector<72x1xi1> to vector<72x1xi1>
    %37 = arith.xori %33, %36 : vector<72x1xi1>
    %38 = arith.andi %37, %31 : vector<72x1xi1>
    %39 = vector.broadcast %27 : i32 to vector<72x1xi32>
    %40 = arith.addi %29, %39 : vector<72x1xi32>
    %41 = arith.select %38, %40, %29 : vector<72x1xi1>, vector<72x1xi32>
    %c8_i32 = arith.constant 8 : i32
    %42 = vector.broadcast %c8_i32 : i32 to vector<72x1xi32>
    %43 = arith.cmpi eq, %41, %42 : vector<72x1xi32>
    %cst_25 = arith.constant 0.000000e+00 : f32
    %44 = vector.shape_cast %43 : vector<72x1xi1> to vector<72x1xi1>
    %45 = vector.broadcast %44 : vector<72x1xi1> to vector<72x128xi1>
    %46 = vector.broadcast %cst_25 : f32 to vector<72x128xf32>
    %47 = arith.select %45, %46, %21 : vector<72x128xi1>, vector<72x128xf32>
    %cst_26 = arith.constant dense<0.000000e+00> : vector<128xf32>
    %48 = vector.multi_reduction <add>, %47, %cst_26 [0] : vector<72x128xf32> to vector<128xf32>
    %49 = vector.shape_cast %48 : vector<128xf32> to vector<1x128xf32>
    %c0_27 = arith.constant 0 : index
    %c0_28 = arith.constant 0 : index
    %c0_29 = arith.constant 0 : index
    %50 = vector.load %arg7[%c0_27, %c0_28, %c0_29] : memref<1x1x128xf32, #tpu.memory_space<vmem>>, vector<1x1x128xf32>
    %51 = vector.shape_cast %50 : vector<1x1x128xf32> to vector<1x128xf32>
    %52 = vector.shape_cast %49 : vector<1x128xf32> to vector<1x1x128xf32>
    tpu.vector_store %arg7[%c0_27, %c0_28, %c0_29], %52 {strides = array<i32>} : memref<1x1x128xf32, #tpu.memory_space<vmem>>, vector<1x1x128xf32>,
    %53 = arith.mulf %47, %47 : vector<72x128xf32>
    %cst_30 = arith.constant dense<0.000000e+00> : vector<128xf32>
    %54 = vector.multi_reduction <add>, %53, %cst_30 [0] : vector<72x128xf32> to vector<128xf32>
    %55 = vector.shape_cast %54 : vector<128xf32> to vector<1x128xf32>
    %c0_31 = arith.constant 0 : index
    %c0_32 = arith.constant 0 : index
    %c0_33 = arith.constant 0 : index
    %56 = vector.load %arg8[%c0_31, %c0_32, %c0_33] : memref<1x1x128xf32, #tpu.memory_space<vmem>>, vector<1x1x128xf32>
    %57 = vector.shape_cast %56 : vector<1x1x128xf32> to vector<1x128xf32>
    %58 = vector.shape_cast %55 : vector<1x128xf32> to vector<1x1x128xf32>
    tpu.vector_store %arg8[%c0_31, %c0_32, %c0_33], %58 {strides = array<i32>} : memref<1x1x128xf32, #tpu.memory_space<vmem>>, vector<1x1x128xf32>,
    return
  }
  func.func @transform_0(%arg0: i32, %arg1: i32) -> (i32, i32, i32) {
    %c0_i32 = arith.constant 0 : i32
    %c0_i32_0 = arith.constant 0 : i32
    %c0_i32_1 = arith.constant 0 : i32
    return %arg1, %c0_i32, %c0_i32_0 : i32, i32, i32
  }
  func.func @transform_1(%arg0: i32, %arg1: i32) -> (i32, i32, i32) {
    %c0_i32 = arith.constant 0 : i32
    %c0_i32_0 = arith.constant 0 : i32
    %c0_i32_1 = arith.constant 0 : i32
    return %arg1, %c0_i32, %c0_i32_0 : i32, i32, i32
  }
  func.func @transform_2(%arg0: i32, %arg1: i32) -> (i32, i32, i32) {
    %c0_i32 = arith.constant 0 : i32
    %c0_i32_0 = arith.constant 0 : i32
    %c0_i32_1 = arith.constant 0 : i32
    return %c0_i32, %c0_i32_0, %arg0 : i32, i32, i32
  }
  func.func @transform_3(%arg0: i32, %arg1: i32) -> (i32, i32) {
    %c0_i32 = arith.constant 0 : i32
    %c0_i32_0 = arith.constant 0 : i32
    return %c0_i32, %arg0 : i32, i32
  }
  func.func @transform_4(%arg0: i32, %arg1: i32) -> (i32, i32, i32) {
    %c0_i32 = arith.constant 0 : i32
    %c0_i32_0 = arith.constant 0 : i32
    return %arg1, %c0_i32, %arg0 : i32, i32, i32
  }
  func.func @transform_5(%arg0: i32, %arg1: i32) -> (i32, i32, i32) {
    %c0_i32 = arith.constant 0 : i32
    %c0_i32_0 = arith.constant 0 : i32
    return %arg1, %c0_i32, %arg0 : i32, i32, i32
  }
  func.func @transform_6(%arg0: i32, %arg1: i32) -> (i32, i32, i32) {
    %c0_i32 = arith.constant 0 : i32
    %c0_i32_0 = arith.constant 0 : i32
    return %arg1, %c0_i32, %arg0 : i32, i32, i32
  }
}

</mosaic_0001>

<llo_original>
// kernel: unet_down_forward.1
$region0: #{unet_down_forward.1}
  #allocation0 [shape = 'u32[]', space=smem, size = 0x4, offset = 0x4, fixed_abs, tag = 'smem constant byte address 0x4 - core index']
  #allocation1 [shape = 'u32[72,128]{1,0:T(1,128)}', space=vmem, size = 0x9000, scoped, tag = 'internal scratch']
  %s0 = inlined_call_operand.vmem [shape: f32[2,88,16], index: 0, kind: input, shape index: {}]
  %s1 = inlined_call_operand.vmem [shape: f32[2,88,16], index: 1, kind: input, shape index: {}]
  %s2 = inlined_call_operand.vmem [shape: f32[3,16,128], index: 2, kind: input, shape index: {}]
  %s3 = inlined_call_operand.vmem [shape: f32[1,128], index: 3, kind: input, shape index: {}]
  %s4 = inlined_call_operand.vmem [shape: f32[2,72,128], index: 4, kind: output, shape index: {0}]
  %s5 = inlined_call_operand.vmem [shape: f32[2,1,128], index: 5, kind: output, shape index: {1}]
  %s6 = inlined_call_operand.vmem [shape: f32[2,1,128], index: 6, kind: output, shape index: {2}]
  %7 = xla_tuple %s4, %s5, %s6
  %s8 = sld [smem:[#allocation0]]
  $region65: #{unet_down_forward.1} parent=0
    _
  %s10 = ssub.s32 1, %s8
  %s11 = scalar_select 0, %s10, %s8
  loop: start=0, step=1, limit=4
  $region2: #{unet_down_forward.1} parent=0 // loop_pre_header
    _
  $region3: #{unet_down_forward.1} parent=0 // loop_header
    %s13 = sphi 0, %s17
    %p14 = scmp.ge.s32.totalorder %s13, 4
    %s20 = sphi 0, %s32
    %s21 = sphi 0, %s28
    %s22 = sphi 0, %s20
    %s23 = sphi 0, %s21
    %s24 = sphi 0, %s22
    %s25 = sphi 0, %s23
    %s35 = sphi 0, %s37
    %s38 = sphi 0, %s35
    %s39 = sphi 0, %s38
    %s55 = sphi 0, %s39
    %s61 = sphi 0, %s63
    %s64 = sphi 0, %s61
    %s65 = sphi 0, %s64
    %s81 = sphi 0, %s65
    %s87 = sphi 0, %s89
    %s90 = sphi 0, %s87
    %s91 = sphi 0, %s90
    %s107 = sphi 0, %s91
    %s113 = sphi 0, %s115
    %s116 = sphi 0, %s113
    %s117 = sphi 0, %s116
    %s133 = sphi 0, %s117
    %s141 = sphi 0, %s143
    %s144 = sphi 0, %s141
    %s145 = sphi 0, %s144
    %s161 = sphi 0, %s145
    %s169 = sphi 0, %s171
    %s172 = sphi 0, %s169
    %s173 = sphi 0, %s172
    %s189 = sphi 0, %s173
    %s197 = sphi 0, %s199
    %s200 = sphi 0, %s197
    %s201 = sphi 0, %s200
    %s217 = sphi 0, %s201
  $region4: #{unet_down_forward.1} parent=0 // loop_header_branch
    %16 = sbr.rel (%p14) target = $region8
  $region5: #{unet_down_forward.1} parent=0 // loop_body
    %s18 = ssub.s32 %s13, 1
    %s19 = ssub.s32 %s13, 2
    %s26 = sadd.s32 1, %s21
    %p27 = scmp.ge.s32.totalorder %s26, 2
    %s28 = scalar_select %p27, 0, %s26
    %s29 = sadd.s32 1, %s20
    %s30 = scalar_select %p27, %s29, %s20
    %p31 = scmp.ge.s32.totalorder %s30, 1
    %s32 = scalar_select %p31, 0, %s30
    %s33 = ssub.s32 %s21, %s28
    %p34 = scmp.eq.s32.totalorder %s33, 0
    %s36 = sadd.s32 %s35, 1
    %s37 = scalar_select %p34, %s35, %s36
    %p40 = pneg %p34
    %p41 = scmp.eq.s32.totalorder %s13, 1
    %p42 = por %p40, %p41
    %p43 = scmp.ne.s32.totalorder %s35, %s38
    %p44 = scmp.eq.s32.totalorder %s13, 0
    %p45 = por %p43, %p44
    %p46 = scmp.ne.s32.totalorder %s35, %s38
    %p47 = scmp.eq.s32.totalorder %s18, 1
    %p48 = por %p46, %p47
    %p49 = scmp.ne.s32.totalorder %s38, %s39
    %p50 = scmp.eq.s32.totalorder %s18, 0
    %p51 = por %p49, %p50
    %p52 = scmp.ne.s32.totalorder %s38, %s39
    %p53 = scmp.eq.s32.totalorder %s19, 1
    %p54 = por %p52, %p53
    %p56 = scmp.ne.s32.totalorder %s39, %s55
    %p57 = scmp.eq.s32.totalorder %s19, 0
    %p58 = por %p56, %p57
    %s59 = ssub.s32 %s21, %s28
    %p60 = scmp.eq.s32.totalorder %s59, 0
    %s62 = sadd.s32 %s61, 1
    %s63 = scalar_select %p60, %s61, %s62
    %p66 = pneg %p60
    %p67 = scmp.eq.s32.totalorder %s13, 1
    %p68 = por %p66, %p67
    %p69 = scmp.ne.s32.totalorder %s61, %s64
    %p70 = scmp.eq.s32.totalorder %s13, 0
    %p71 = por %p69, %p70
    %p72 = scmp.ne.s32.totalorder %s61, %s64
    %p73 = scmp.eq.s32.totalorder %s18, 1
    %p74 = por %p72, %p73
    %p75 = scmp.ne.s32.totalorder %s64, %s65
    %p76 = scmp.eq.s32.totalorder %s18, 0
    %p77 = por %p75, %p76
    %p78 = scmp.ne.s32.totalorder %s64, %s65
    %p79 = scmp.eq.s32.totalorder %s19, 1
    %p80 = por %p78, %p79
    %p82 = scmp.ne.s32.totalorder %s65, %s81
    %p83 = scmp.eq.s32.totalorder %s19, 0
    %p84 = por %p82, %p83
    %s85 = ssub.s32 %s20, %s32
    %p86 = scmp.eq.s32.totalorder %s85, 0
    %s88 = sadd.s32 %s87, 1
    %s89 = scalar_select %p86, %s87, %s88
    %p92 = pneg %p86
    %p93 = scmp.eq.s32.totalorder %s13, 1
    %p94 = por %p92, %p93
    %p95 = scmp.ne.s32.totalorder %s87, %s90
    %p96 = scmp.eq.s32.totalorder %s13, 0
    %p97 = por %p95, %p96
    %p98 = scmp.ne.s32.totalorder %s87, %s90
    %p99 = scmp.eq.s32.totalorder %s18, 1
    %p100 = por %p98, %p99
    %p101 = scmp.ne.s32.totalorder %s90, %s91
    %p102 = scmp.eq.s32.totalorder %s18, 0
    %p103 = por %p101, %p102
    %p104 = scmp.ne.s32.totalorder %s90, %s91
    %p105 = scmp.eq.s32.totalorder %s19, 1
    %p106 = por %p104, %p105
    %p108 = scmp.ne.s32.totalorder %s91, %s107
    %p109 = scmp.eq.s32.totalorder %s19, 0
    %p110 = por %p108, %p109
    %s111 = ssub.s32 %s20, %s32
    %p112 = scmp.eq.s32.totalorder %s111, 0
    %s114 = sadd.s32 %s113, 1
    %s115 = scalar_select %p112, %s113, %s114
    %p118 = pneg %p112
    %p119 = scmp.eq.s32.totalorder %s13, 1
    %p120 = por %p118, %p119
    %p121 = scmp.ne.s32.totalorder %s113, %s116
    %p122 = scmp.eq.s32.totalorder %s13, 0
    %p123 = por %p121, %p122
    %p124 = scmp.ne.s32.totalorder %s113, %s116
    %p125 = scmp.eq.s32.totalorder %s18, 1
    %p126 = por %p124, %p125
    %p127 = scmp.ne.s32.totalorder %s116, %s117
    %p128 = scmp.eq.s32.totalorder %s18, 0
    %p129 = por %p127, %p128
    %p130 = scmp.ne.s32.totalorder %s116, %s117
    %p131 = scmp.eq.s32.totalorder %s19, 1
    %p132 = por %p130, %p131
    %p134 = scmp.ne.s32.totalorder %s117, %s133
    %p135 = scmp.eq.s32.totalorder %s19, 0
    %p136 = por %p134, %p135
    %s137 = ssub.s32 %s21, %s28
    %s138 = ssub.s32 %s20, %s32
    %s139 = sor.u32 %s137, %s138
    %p140 = scmp.eq.s32.totalorder %s139, 0
    %s142 = sadd.s32 %s141, 1
    %s143 = scalar_select %p140, %s141, %s142
    %p146 = pneg %p140
    %p147 = scmp.eq.s32.totalorder %s13, 1
    %p148 = por %p146, %p147
    %p149 = scmp.ne.s32.totalorder %s141, %s144
    %p150 = scmp.eq.s32.totalorder %s13, 0
    %p151 = por %p149, %p150
    %p152 = scmp.ne.s32.totalorder %s141, %s144
    %p153 = scmp.eq.s32.totalorder %s18, 1
    %p154 = por %p152, %p153
    %p155 = scmp.ne.s32.totalorder %s144, %s145
    %p156 = scmp.eq.s32.totalorder %s18, 0
    %p157 = por %p155, %p156
    %p158 = scmp.ne.s32.totalorder %s144, %s145
    %p159 = scmp.eq.s32.totalorder %s19, 1
    %p160 = por %p158, %p159
    %p162 = scmp.ne.s32.totalorder %s145, %s161
    %p163 = scmp.eq.s32.totalorder %s19, 0
    %p164 = por %p162, %p163
    %s165 = ssub.s32 %s21, %s28
    %s166 = ssub.s32 %s20, %s32
    %s167 = sor.u32 %s165, %s166
    %p168 = scmp.eq.s32.totalorder %s167, 0
    %s170 = sadd.s32 %s169, 1
    %s171 = scalar_select %p168, %s169, %s170
    %p174 = pneg %p168
    %p175 = scmp.eq.s32.totalorder %s13, 1
    %p176 = por %p174, %p175
    %p177 = scmp.ne.s32.totalorder %s169, %s172
    %p178 = scmp.eq.s32.totalorder %s13, 0
    %p179 = por %p177, %p178
    %p180 = scmp.ne.s32.totalorder %s169, %s172
    %p181 = scmp.eq.s32.totalorder %s18, 1
    %p182 = por %p180, %p181
    %p183 = scmp.ne.s32.totalorder %s172, %s173
    %p184 = scmp.eq.s32.totalorder %s18, 0
    %p185 = por %p183, %p184
    %p186 = scmp.ne.s32.totalorder %s172, %s173
    %p187 = scmp.eq.s32.totalorder %s19, 1
    %p188 = por %p186, %p187
    %p190 = scmp.ne.s32.totalorder %s173, %s189
    %p191 = scmp.eq.s32.totalorder %s19, 0
    %p192 = por %p190, %p191
    %s193 = ssub.s32 %s21, %s28
    %s194 = ssub.s32 %s20, %s32
    %s195 = sor.u32 %s193, %s194
    %p196 = scmp.eq.s32.totalorder %s195, 0
    %s198 = sadd.s32 %s197, 1
    %s199 = scalar_select %p196, %s197, %s198
    %p202 = pneg %p196
    %p203 = scmp.eq.s32.totalorder %s13, 1
    %p204 = por %p202, %p203
    %p205 = scmp.ne.s32.totalorder %s197, %s200
    %p206 = scmp.eq.s32.totalorder %s13, 0
    %p207 = por %p205, %p206
    %p208 = scmp.ne.s32.totalorder %s197, %s200
    %p209 = scmp.eq.s32.totalorder %s18, 1
    %p210 = por %p208, %p209
    %p211 = scmp.ne.s32.totalorder %s200, %s201
    %p212 = scmp.eq.s32.totalorder %s18, 0
    %p213 = por %p211, %p212
    %p214 = scmp.ne.s32.totalorder %s200, %s201
    %p215 = scmp.eq.s32.totalorder %s19, 1
    %p216 = por %p214, %p215
    %p218 = scmp.ne.s32.totalorder %s201, %s217
    %p219 = scmp.eq.s32.totalorder %s19, 0
    %p220 = por %p218, %p219
    %p221 = scmp.le.s32.totalorder 1, %s13
    %p222 = scmp.lt.s32.totalorder %s13, 3
    %p223 = pnand %p221, %p222
    %p224 = pneg %p223
    // Predicated region
    $region9: #{unet_down_forward.1} parent=5 // pred_check
      _
    $region10: #{unet_down_forward.1} parent=5 // pred_check_branch
      %226 = sbr.rel (%p223) target = $region12
    $region11: #{unet_down_forward.1} parent=5 // pred_region
      %s227 = ssub.s32 %s13, 1
      // Predicated region
      $region13: #{unet_down_forward.1} parent=11 // pred_check
        %p228 = pneg %p103
      $region14: #{unet_down_forward.1} parent=11 // pred_check_branch
        %230 = sbr.rel (%p228) target = $region16
      $region15: #{unet_down_forward.1} parent=11 // pred_region
        %p231 = scmp.lt.s32.totalorder %s22, 0
        %s232 = scalar_select %p231, %s22, 0
        %s233 = smul.addr %s232, 8
        %s234 = scalar_lea.vmem %s2, %s233
      $region16: #{unet_down_forward.1} parent=11 // pred_fallthru
        _
      // Predicated region
      $region17: #{unet_down_forward.1} parent=11 // pred_check
        %p235 = pneg %p129
      $region18: #{unet_down_forward.1} parent=11 // pred_check_branch
        %237 = sbr.rel (%p235) target = $region20
      $region19: #{unet_down_forward.1} parent=11 // pred_region
        %p238 = scmp.lt.s32.totalorder %s22, 0
        %s239 = scalar_select %p238, %s22, 0
        %s240 = scalar_lea.vmem %s3, %s239
      $region20: #{unet_down_forward.1} parent=11 // pred_fallthru
        _
    $region12: #{unet_down_forward.1} parent=5 // pred_fallthru
      _
    %p241 = scmp.lt.s32.totalorder %s13, 2
    // Predicated region
    $region21: #{unet_down_forward.1} parent=5 // pred_check
      %p242 = pneg %p241
    $region22: #{unet_down_forward.1} parent=5 // pred_check_branch
      %244 = sbr.rel (%p242) target = $region24
    $region23: #{unet_down_forward.1} parent=5 // pred_region
      // Predicated region
      $region25: #{unet_down_forward.1} parent=23 // pred_check
        %p245 = pneg %p45
      $region26: #{unet_down_forward.1} parent=23 // pred_check_branch
        %247 = sbr.rel (%p245) target = $region28
      $region27: #{unet_down_forward.1} parent=23 // pred_region
        %p248 = scmp.lt.s32.totalorder %s21, 1
        %s249 = scalar_select %p248, %s21, 1
        %s250 = smul.addr %s249, 11
        %s251 = smul.addr %s250, 8
        %s252 = scalar_lea.vmem %s0, %s251
      $region28: #{unet_down_forward.1} parent=23 // pred_fallthru
        _
      // Predicated region
      $region29: #{unet_down_forward.1} parent=23 // pred_check
        %p253 = pneg %p71
      $region30: #{unet_down_forward.1} parent=23 // pred_check_branch
        %255 = sbr.rel (%p253) target = $region32
      $region31: #{unet_down_forward.1} parent=23 // pred_region
        %p256 = scmp.lt.s32.totalorder %s21, 1
        %s257 = scalar_select %p256, %s21, 1
        %s258 = smul.addr %s257, 11
        %s259 = smul.addr %s258, 8
        %s260 = scalar_lea.vmem %s1, %s259
      $region32: #{unet_down_forward.1} parent=23 // pred_fallthru
        _
    $region24: #{unet_down_forward.1} parent=5 // pred_fallthru
      _
    %p261 = scmp.le.s32.totalorder 1, %s13
    %p262 = scmp.lt.s32.totalorder %s13, 3
    %p263 = pnand %p261, %p262
    %p264 = pneg %p263
    // Predicated region
    $region33: #{unet_down_forward.1} parent=5 // pred_check
      _
    $region34: #{unet_down_forward.1} parent=5 // pred_check_branch
      %266 = sbr.rel (%p263) target = $region36
    $region35: #{unet_down_forward.1} parent=5 // pred_region
      %s267 = ssub.s32 %s13, 1
      %p268 = scmp.lt.s32.totalorder %s23, 1
      %s269 = scalar_select %p268, %s23, 1
      %s270 = smul.addr %s269, 11
      %s271 = smul.addr %s270, 8
      %s272 = scalar_lea.vmem %s0, %s271
      %p273 = pneg %p51
      %p274 = pneg %p48
      %p275 = scmp.lt.s32.totalorder %s23, 1
      %s276 = scalar_select %p275, %s23, 1
      %s277 = smul.addr %s276, 11
      %s278 = smul.addr %s277, 8
      %s279 = scalar_lea.vmem %s1, %s278
      %p280 = pneg %p77
      %p281 = pneg %p74
      %p282 = scmp.lt.s32.totalorder %s22, 0
      %s283 = scalar_select %p282, %s22, 0
      %s284 = smul.addr %s283, 8
      %s285 = scalar_lea.vmem %s2, %s284
      %p286 = pneg %p103
      %p287 = pneg %p100
      %p288 = scmp.lt.s32.totalorder %s22, 0
      %s289 = scalar_select %p288, %s22, 0
      %s290 = scalar_lea.vmem %s3, %s289
      %p291 = pneg %p129
      %p292 = pneg %p126
      %p293 = pneg %p157
      %p294 = pneg %p154
      %p295 = scmp.lt.s32.totalorder %s23, 1
      %s296 = scalar_select %p295, %s23, 1
      %p297 = scmp.lt.s32.totalorder %s22, 0
      %s298 = scalar_select %p297, %s22, 0
      %s299 = smul.addr %s296, 9
      %s300 = sadd.s32 %s298, %s299
      %s301 = smul.addr %s300, 8
      %s302 = scalar_lea.vmem %s4, %s301
      %p303 = pneg %p185
      %p304 = pneg %p182
      %p305 = scmp.lt.s32.totalorder %s23, 1
      %s306 = scalar_select %p305, %s23, 1
      %p307 = scmp.lt.s32.totalorder %s22, 0
      %s308 = scalar_select %p307, %s22, 0
      %s309 = sadd.s32 %s308, %s306
      %s310 = scalar_lea.vmem %s5, %s309
      %p311 = pneg %p213
      %p312 = pneg %p210
      %p313 = scmp.lt.s32.totalorder %s23, 1
      %s314 = scalar_select %p313, %s23, 1
      %p315 = scmp.lt.s32.totalorder %s22, 0
      %s316 = scalar_select %p315, %s22, 0
      %s317 = sadd.s32 %s316, %s314
      %s318 = scalar_lea.vmem %s6, %s317
      %p319 = scmp.lt.s32.totalorder %s23, 1
      %s320 = scalar_select %p319, %s23, 1
      %s321 = smul.addr %s320, 11
      %s322 = smul.addr %s321, 8
      %s323 = scalar_lea.vmem %s0, %s322
      %p324 = scmp.lt.s32.totalorder %s23, 1
      %s325 = scalar_select %p324, %s23, 1
      %s326 = smul.addr %s325, 11
      %s327 = smul.addr %s326, 8
      %s328 = scalar_lea.vmem %s1, %s327
      %p329 = scmp.lt.s32.totalorder %s22, 0
      %s330 = scalar_select %p329, %s22, 0
      %s331 = smul.addr %s330, 8
      %s332 = scalar_lea.vmem %s2, %s331
      %p333 = scmp.lt.s32.totalorder %s22, 0
      %s334 = scalar_select %p333, %s22, 0
      %s335 = scalar_lea.vmem %s3, %s334
      %p336 = scmp.lt.s32.totalorder %s23, 1
      %s337 = scalar_select %p336, %s23, 1
      %p338 = scmp.lt.s32.totalorder %s22, 0
      %s339 = scalar_select %p338, %s22, 0
      %s340 = smul.addr %s337, 9
      %s341 = sadd.s32 %s339, %s340
      %s342 = smul.addr %s341, 8
      %s343 = scalar_lea.vmem %s4, %s342
      %p344 = scmp.lt.s32.totalorder %s23, 1
      %s345 = scalar_select %p344, %s23, 1
      %p346 = scmp.lt.s32.totalorder %s22, 0
      %s347 = scalar_select %p346, %s22, 0
      %s348 = sadd.s32 %s347, %s345
      %s349 = scalar_lea.vmem %s5, %s348
      %p350 = scmp.lt.s32.totalorder %s23, 1
      %s351 = scalar_select %p350, %s23, 1
      %p352 = scmp.lt.s32.totalorder %s22, 0
      %s353 = scalar_select %p352, %s22, 0
      %s354 = sadd.s32 %s353, %s351
      %s355 = scalar_lea.vmem %s6, %s354
      %v356 = vld [vmem:[%s323] sm:$0xff]
      %v357 = vld [vmem:[%s323 + $0x8] sm:$0xff]
      %v358 = vld [vmem:[%s323 + $0x10] sm:$0xff]
      %v359 = vld [vmem:[%s323 + $0x18] sm:$0xff]
      %v360 = vld [vmem:[%s323 + $0x20] sm:$0xff]
      %v361 = vld [vmem:[%s323 + $0x28] sm:$0xff]
      %v362 = vld [vmem:[%s323 + $0x30] sm:$0xff]
      %v363 = vld [vmem:[%s323 + $0x38] sm:$0xff]
      %v364 = vld [vmem:[%s323 + $0x40] sm:$0xff]
      %v365 = vld [vmem:[%s332] sm:$0xff]
      %v366 = vld [vmem:[%s332 + $0x8] sm:$0xff]
      %v367 = vld [vmem:[%s335] sm:$0x1]
      %v369 = vperm.slane %v367, 0
      %vm371 = vcmask 130048
      %v373 = vsel %vm371, %v356, 0
      %v376 = vsel %vm371, %v357, 0
      %v379 = vsel %vm371, %v358, 0
      %v382 = vsel %vm371, %v359, 0
      %v385 = vsel %vm371, %v360, 0
      %v388 = vsel %vm371, %v361, 0
      %v391 = vsel %vm371, %v362, 0
      %v394 = vsel %vm371, %v363, 0
      %v397 = vsel %vm371, %v364, 0
      %399 = vmatpush.msra.mxu0 0.0
      %400 = vmatpush.msra.mxu0 0.0
      %401 = vmatpush.msra.mxu0 0.0
      %402 = vmatpush.msra.mxu0 0.0
      %403 = vmatpush.msra.mxu0 0.0
      %404 = vmatpush.msra.mxu0 0.0
      %405 = vmatpush.msra.mxu0 0.0
      %406 = vmatpush.msra.mxu0 0.0
      %407 = vmatpush.msra.mxu0 0.0
      %408 = vmatpush.msra.mxu0 0.0
      %409 = vmatpush.msra.mxu0 0.0
      %410 = vmatpush.msra.mxu0 0.0
      %411 = vmatpush.msra.mxu0 0.0
      %412 = vmatpush.msra.mxu0 0.0
      %413 = vmatpush.msra.mxu0 %v366
      %414 = vmatpush.msra.mxu0 %v365
      %415 = vmatmul.f32.gmra.mxu0 %v373
      %v416 = vpop.f32.mrf.mxu0
      %v417 = vadd.f32 %v369, %v416
      %418 = vmatmul.f32.gmra.mxu0 %v376
      %v419 = vpop.f32.mrf.mxu0
      %v420 = vadd.f32 %v369, %v419
      %421 = vmatmul.f32.gmra.mxu0 %v379
      %v422 = vpop.f32.mrf.mxu0
      %v423 = vadd.f32 %v369, %v422
      %424 = vmatmul.f32.gmra.mxu0 %v382
      %v425 = vpop.f32.mrf.mxu0
      %v426 = vadd.f32 %v369, %v425
      %427 = vmatmul.f32.gmra.mxu0 %v385
      %v428 = vpop.f32.mrf.mxu0
      %v429 = vadd.f32 %v369, %v428
      %430 = vmatmul.f32.gmra.mxu0 %v388
      %v431 = vpop.f32.mrf.mxu0
      %v432 = vadd.f32 %v369, %v431
      %433 = vmatmul.f32.gmra.mxu0 %v391
      %v434 = vpop.f32.mrf.mxu0
      %v435 = vadd.f32 %v369, %v434
      %436 = vmatmul.f32.gmra.mxu0 %v394
      %v437 = vpop.f32.mrf.mxu0
      %v438 = vadd.f32 %v369, %v437
      %439 = vmatmul.f32.gmra.mxu0 %v397
      %v440 = vpop.f32.mrf.mxu0
      %v441 = vadd.f32 %v369, %v440
      %442 = vdwg.mxu0
      %v443 = vld [vmem:[%s328] sm:$0xff]
      %v444 = vld [vmem:[%s328 + $0x8] sm:$0xff]
      %v445 = vld [vmem:[%s328 + $0x10] sm:$0xff]
      %v446 = vld [vmem:[%s328 + $0x18] sm:$0xff]
      %v447 = vld [vmem:[%s328 + $0x20] sm:$0xff]
      %v448 = vld [vmem:[%s328 + $0x28] sm:$0xff]
      %v449 = vld [vmem:[%s328 + $0x30] sm:$0xff]
      %v450 = vld [vmem:[%s328 + $0x38] sm:$0xff]
      %v451 = vld [vmem:[%s328 + $0x40] sm:$0xff]
      %s452 = scalar_lea.vmem %s332, 16
      %v453 = vld [vmem:[%s452] sm:$0xff]
      %v454 = vld [vmem:[%s452 + $0x8] sm:$0xff]
      %v456 = vsel %vm371, %v443, 0
      %v459 = vsel %vm371, %v444, 0
      %v462 = vsel %vm371, %v445, 0
      %v465 = vsel %vm371, %v446, 0
      %v468 = vsel %vm371, %v447, 0
      %v471 = vsel %vm371, %v448, 0
      %v474 = vsel %vm371, %v449, 0
      %v477 = vsel %vm371, %v450, 0
      %v480 = vsel %vm371, %v451, 0
      %482 = vmatpush.msra.mxu0 0.0
      %483 = vmatpush.msra.mxu0 0.0
      %484 = vmatpush.msra.mxu0 0.0
      %485 = vmatpush.msra.mxu0 0.0
      %486 = vmatpush.msra.mxu0 0.0
      %487 = vmatpush.msra.mxu0 0.0
      %488 = vmatpush.msra.mxu0 0.0
      %489 = vmatpush.msra.mxu0 0.0
      %490 = vmatpush.msra.mxu0 0.0
      %491 = vmatpush.msra.mxu0 0.0
      %492 = vmatpush.msra.mxu0 0.0
      %493 = vmatpush.msra.mxu0 0.0
      %494 = vmatpush.msra.mxu0 0.0
      %495 = vmatpush.msra.mxu0 0.0
      %496 = vmatpush.msra.mxu0 %v454
      %497 = vmatpush.msra.mxu0 %v453
      %498 = vmatmul.f32.gmra.mxu0 %v456
      %v499 = vpop.f32.mrf.mxu0
      %v500 = vadd.f32 0.0, %v499
      %501 = vmatmul.f32.gmra.mxu0 %v459
      %v502 = vpop.f32.mrf.mxu0
      %v503 = vadd.f32 0.0, %v502
      %504 = vmatmul.f32.gmra.mxu0 %v462
      %v505 = vpop.f32.mrf.mxu0
      %v506 = vadd.f32 0.0, %v505
      %507 = vmatmul.f32.gmra.mxu0 %v465
      %v508 = vpop.f32.mrf.mxu0
      %v509 = vadd.f32 0.0, %v508
      %510 = vmatmul.f32.gmra.mxu0 %v468
      %v511 = vpop.f32.mrf.mxu0
      %v512 = vadd.f32 0.0, %v511
      %513 = vmatmul.f32.gmra.mxu0 %v471
      %v514 = vpop.f32.mrf.mxu0
      %v515 = vadd.f32 0.0, %v514
      %516 = vmatmul.f32.gmra.mxu0 %v474
      %v517 = vpop.f32.mrf.mxu0
      %v518 = vadd.f32 0.0, %v517
      %519 = vmatmul.f32.gmra.mxu0 %v477
      %v520 = vpop.f32.mrf.mxu0
      %v521 = vadd.f32 0.0, %v520
      %522 = vmatmul.f32.gmra.mxu0 %v480
      %v523 = vpop.f32.mrf.mxu0
      %v524 = vadd.f32 0.0, %v523
      %525 = vdwg.mxu0
      %v526 = vadd.f32 %v417, %v500
      %v527 = vadd.f32 %v420, %v503
      %v528 = vadd.f32 %v423, %v506
      %v529 = vadd.f32 %v426, %v509
      %v530 = vadd.f32 %v429, %v512
      %v531 = vadd.f32 %v432, %v515
      %v532 = vadd.f32 %v435, %v518
      %v533 = vadd.f32 %v438, %v521
      %v534 = vadd.f32 %v441, %v524
      %v535 = vld [vmem:[%s323 + $0x9] sm:$0xff]
      %v536 = vld [vmem:[%s323 + $0x11] sm:$0xff]
      %v537 = vld [vmem:[%s323 + $0x19] sm:$0xff]
      %v538 = vld [vmem:[%s323 + $0x21] sm:$0xff]
      %v539 = vld [vmem:[%s323 + $0x29] sm:$0xff]
      %v540 = vld [vmem:[%s323 + $0x31] sm:$0xff]
      %v541 = vld [vmem:[%s323 + $0x39] sm:$0xff]
      %v542 = vld [vmem:[%s323 + $0x41] sm:$0xff]
      %v543 = vld [vmem:[%s323 + $0x49] sm:$0xff]
      %s544 = scalar_lea.vmem %s332, 32
      %v545 = vld [vmem:[%s544] sm:$0xff]
      %v546 = vld [vmem:[%s544 + $0x8] sm:$0xff]
      %v548 = vsel %vm371, %v535, 0
      %v551 = vsel %vm371, %v536, 0
      %v554 = vsel %vm371, %v537, 0
      %v557 = vsel %vm371, %v538, 0
      %v560 = vsel %vm371, %v539, 0
      %v563 = vsel %vm371, %v540, 0
      %v566 = vsel %vm371, %v541, 0
      %v569 = vsel %vm371, %v542, 0
      %v572 = vsel %vm371, %v543, 0
      %574 = vmatpush.msra.mxu0 0.0
      %575 = vmatpush.msra.mxu0 0.0
      %576 = vmatpush.msra.mxu0 0.0
      %577 = vmatpush.msra.mxu0 0.0
      %578 = vmatpush.msra.mxu0 0.0
      %579 = vmatpush.msra.mxu0 0.0
      %580 = vmatpush.msra.mxu0 0.0
      %581 = vmatpush.msra.mxu0 0.0
      %582 = vmatpush.msra.mxu0 0.0
      %583 = vmatpush.msra.mxu0 0.0
      %584 = vmatpush.msra.mxu0 0.0
      %585 = vmatpush.msra.mxu0 0.0
      %586 = vmatpush.msra.mxu0 0.0
      %587 = vmatpush.msra.mxu0 0.0
      %588 = vmatpush.msra.mxu0 %v546
      %589 = vmatpush.msra.mxu0 %v545
      %590 = vmatmul.f32.gmra.mxu0 %v548
      %v591 = vpop.f32.mrf.mxu0
      %v592 = vadd.f32 0.0, %v591
      %593 = vmatmul.f32.gmra.mxu0 %v551
      %v594 = vpop.f32.mrf.mxu0
      %v595 = vadd.f32 0.0, %v594
      %596 = vmatmul.f32.gmra.mxu0 %v554
      %v597 = vpop.f32.mrf.mxu0
      %v598 = vadd.f32 0.0, %v597
      %599 = vmatmul.f32.gmra.mxu0 %v557
      %v600 = vpop.f32.mrf.mxu0
      %v601 = vadd.f32 0.0, %v600
      %602 = vmatmul.f32.gmra.mxu0 %v560
      %v603 = vpop.f32.mrf.mxu0
      %v604 = vadd.f32 0.0, %v603
      %605 = vmatmul.f32.gmra.mxu0 %v563
      %v606 = vpop.f32.mrf.mxu0
      %v607 = vadd.f32 0.0, %v606
      %608 = vmatmul.f32.gmra.mxu0 %v566
      %v609 = vpop.f32.mrf.mxu0
      %v610 = vadd.f32 0.0, %v609
      %611 = vmatmul.f32.gmra.mxu0 %v569
      %v612 = vpop.f32.mrf.mxu0
      %v613 = vadd.f32 0.0, %v612
      %614 = vmatmul.f32.gmra.mxu0 %v572
      %v615 = vpop.f32.mrf.mxu0
      %v616 = vadd.f32 0.0, %v615
      %617 = vdwg.mxu0
      %v618 = vadd.f32 %v526, %v592
      %v619 = vadd.f32 %v527, %v595
      %v620 = vadd.f32 %v528, %v598
      %v621 = vadd.f32 %v529, %v601
      %v622 = vadd.f32 %v530, %v604
      %v623 = vadd.f32 %v531, %v607
      %v624 = vadd.f32 %v532, %v610
      %v625 = vadd.f32 %v533, %v613
      %v626 = vadd.f32 %v534, %v616
      %v627 = vmax.f32 %v618, 0.0
      %v628 = vmax.f32 %v619, 0.0
      %v629 = vmax.f32 %v620, 0.0
      %v630 = vmax.f32 %v621, 0.0
      %v631 = vmax.f32 %v622, 0.0
      %v632 = vmax.f32 %v623, 0.0
      %v633 = vmax.f32 %v624, 0.0
      %v634 = vmax.f32 %v625, 0.0
      %v635 = vmax.f32 %v626, 0.0
      %636 = vst [vmem:[%s343] sm:$0xff] %v627
      %637 = vst [vmem:[%s343 + $0x8] sm:$0xff] %v628
      %638 = vst [vmem:[%s343 + $0x10] sm:$0xff] %v629
      %639 = vst [vmem:[%s343 + $0x18] sm:$0xff] %v630
      %640 = vst [vmem:[%s343 + $0x20] sm:$0xff] %v631
      %641 = vst [vmem:[%s343 + $0x28] sm:$0xff] %v632
      %642 = vst [vmem:[%s343 + $0x30] sm:$0xff] %v633
      %643 = vst [vmem:[%s343 + $0x38] sm:$0xff] %v634
      %644 = vst [vmem:[%s343 + $0x40] sm:$0xff] %v635
      %v645 = vlaneseq
      %v646 = vshrl.u32 %v645, 7
      %v647 = vadd.s32 %v646, 8
      %v648 = vadd.s32 %v646, 16
      %v649 = vadd.s32 %v646, 24
      %v650 = vadd.s32 %v646, 32
      %v651 = vadd.s32 %v646, 40
      %v652 = vadd.s32 %v646, 48
      %v653 = vadd.s32 %v646, 56
      %v654 = vadd.s32 %v646, 64
      %vm655 = vcmp.lt.s32.totalorder %v646, 0
      %v656 = vsub.s32 0, %v646
      %v657 = vsel %vm655, %v656, %v646
      %v658 = vand.u32 %v657, 65535
      %v659 = vshrl.u32 %v657, 16
      %v661 = vmul.u32 %v658, 14564
      %v662 = vmul.u32 %v658, 58254
      %v663 = vmul.u32 %v659, 14564
      %v664 = vmul.u32 %v659, 58254
      %v665 = vshll.u32 %v662, 16
      %v666 = vshrl.u32 %v662, 16
      %v667 = vshll.u32 %v663, 16
      %v668 = vshrl.u32 %v663, 16
      %vm669 = vc.u32 %v661, %v665
      %v670 = vsel %vm669, 1, 0
      %v671 = vadd.s32 %v661, %v665
      %v672 = vadd.s32 %v664, %v670
      %vm673 = vc.u32 %v671, %v667
      %v674 = vsel %vm673, 1, 0
      %v675 = vadd.s32 %v671, %v667
      %v676 = vadd.s32 %v672, %v674
      %v677 = vadd.s32 %v676, %v666
      %v678 = vadd.s32 %v677, %v668
      %v679 = vshrl.u32 %v678, 3
      %v680 = vmul.u32 %v679, 9
      %v681 = vsub.s32 %v657, %v680
      %v682 = vsub.s32 0, %v681
      %v683 = vsel %vm655, %v682, %v681
      %vm684 = vcmp.lt.s32.totalorder %v647, 0
      %v685 = vsub.s32 0, %v647
      %v686 = vsel %vm684, %v685, %v647
      %v687 = vand.u32 %v686, 65535
      %v688 = vshrl.u32 %v686, 16
      %v690 = vmul.u32 %v687, 14564
      %v691 = vmul.u32 %v687, 58254
      %v692 = vmul.u32 %v688, 14564
      %v693 = vmul.u32 %v688, 58254
      %v694 = vshll.u32 %v691, 16
      %v695 = vshrl.u32 %v691, 16
      %v696 = vshll.u32 %v692, 16
      %v697 = vshrl.u32 %v692, 16
      %vm698 = vc.u32 %v690, %v694
      %v699 = vsel %vm698, 1, 0
      %v700 = vadd.s32 %v690, %v694
      %v701 = vadd.s32 %v693, %v699
      %vm702 = vc.u32 %v700, %v696
      %v703 = vsel %vm702, 1, 0
      %v704 = vadd.s32 %v700, %v696
      %v705 = vadd.s32 %v701, %v703
      %v706 = vadd.s32 %v705, %v695
      %v707 = vadd.s32 %v706, %v697
      %v708 = vshrl.u32 %v707, 3
      %v709 = vmul.u32 %v708, 9
      %v710 = vsub.s32 %v686, %v709
      %v711 = vsub.s32 0, %v710
      %v712 = vsel %vm684, %v711, %v710
      %vm713 = vcmp.lt.s32.totalorder %v648, 0
      %v714 = vsub.s32 0, %v648
      %v715 = vsel %vm713, %v714, %v648
      %v716 = vand.u32 %v715, 65535
      %v717 = vshrl.u32 %v715, 16
      %v719 = vmul.u32 %v716, 14564
      %v720 = vmul.u32 %v716, 58254
      %v721 = vmul.u32 %v717, 14564
      %v722 = vmul.u32 %v717, 58254
      %v723 = vshll.u32 %v720, 16
      %v724 = vshrl.u32 %v720, 16
      %v725 = vshll.u32 %v721, 16
      %v726 = vshrl.u32 %v721, 16
      %vm727 = vc.u32 %v719, %v723
      %v728 = vsel %vm727, 1, 0
      %v729 = vadd.s32 %v719, %v723
      %v730 = vadd.s32 %v722, %v728
      %vm731 = vc.u32 %v729, %v725
      %v732 = vsel %vm731, 1, 0
      %v733 = vadd.s32 %v729, %v725
      %v734 = vadd.s32 %v730, %v732
      %v735 = vadd.s32 %v734, %v724
      %v736 = vadd.s32 %v735, %v726
      %v737 = vshrl.u32 %v736, 3
      %v738 = vmul.u32 %v737, 9
      %v739 = vsub.s32 %v715, %v738
      %v740 = vsub.s32 0, %v739
      %v741 = vsel %vm713, %v740, %v739
      %vm742 = vcmp.lt.s32.totalorder %v649, 0
      %v743 = vsub.s32 0, %v649
      %v744 = vsel %vm742, %v743, %v649
      %v745 = vand.u32 %v744, 65535
      %v746 = vshrl.u32 %v744, 16
      %v748 = vmul.u32 %v745, 14564
      %v749 = vmul.u32 %v745, 58254
      %v750 = vmul.u32 %v746, 14564
      %v751 = vmul.u32 %v746, 58254
      %v752 = vshll.u32 %v749, 16
      %v753 = vshrl.u32 %v749, 16
      %v754 = vshll.u32 %v750, 16
      %v755 = vshrl.u32 %v750, 16
      %vm756 = vc.u32 %v748, %v752
      %v757 = vsel %vm756, 1, 0
      %v758 = vadd.s32 %v748, %v752
      %v759 = vadd.s32 %v751, %v757
      %vm760 = vc.u32 %v758, %v754
      %v761 = vsel %vm760, 1, 0
      %v762 = vadd.s32 %v758, %v754
      %v763 = vadd.s32 %v759, %v761
      %v764 = vadd.s32 %v763, %v753
      %v765 = vadd.s32 %v764, %v755
      %v766 = vshrl.u32 %v765, 3
      %v767 = vmul.u32 %v766, 9
      %v768 = vsub.s32 %v744, %v767
      %v769 = vsub.s32 0, %v768
      %v770 = vsel %vm742, %v769, %v768
      %vm771 = vcmp.lt.s32.totalorder %v650, 0
      %v772 = vsub.s32 0, %v650
      %v773 = vsel %vm771, %v772, %v650
      %v774 = vand.u32 %v773, 65535
      %v775 = vshrl.u32 %v773, 16
      %v777 = vmul.u32 %v774, 14564
      %v778 = vmul.u32 %v774, 58254
      %v779 = vmul.u32 %v775, 14564
      %v780 = vmul.u32 %v775, 58254
      %v781 = vshll.u32 %v778, 16
      %v782 = vshrl.u32 %v778, 16
      %v783 = vshll.u32 %v779, 16
      %v784 = vshrl.u32 %v779, 16
      %vm785 = vc.u32 %v777, %v781
      %v786 = vsel %vm785, 1, 0
      %v787 = vadd.s32 %v777, %v781
      %v788 = vadd.s32 %v780, %v786
      %vm789 = vc.u32 %v787, %v783
      %v790 = vsel %vm789, 1, 0
      %v791 = vadd.s32 %v787, %v783
      %v792 = vadd.s32 %v788, %v790
      %v793 = vadd.s32 %v792, %v782
      %v794 = vadd.s32 %v793, %v784
      %v795 = vshrl.u32 %v794, 3
      %v796 = vmul.u32 %v795, 9
      %v797 = vsub.s32 %v773, %v796
      %v798 = vsub.s32 0, %v797
      %v799 = vsel %vm771, %v798, %v797
      %vm800 = vcmp.lt.s32.totalorder %v651, 0
      %v801 = vsub.s32 0, %v651
      %v802 = vsel %vm800, %v801, %v651
      %v803 = vand.u32 %v802, 65535
      %v804 = vshrl.u32 %v802, 16
      %v806 = vmul.u32 %v803, 14564
      %v807 = vmul.u32 %v803, 58254
      %v808 = vmul.u32 %v804, 14564
      %v809 = vmul.u32 %v804, 58254
      %v810 = vshll.u32 %v807, 16
      %v811 = vshrl.u32 %v807, 16
      %v812 = vshll.u32 %v808, 16
      %v813 = vshrl.u32 %v808, 16
      %vm814 = vc.u32 %v806, %v810
      %v815 = vsel %vm814, 1, 0
      %v816 = vadd.s32 %v806, %v810
      %v817 = vadd.s32 %v809, %v815
      %vm818 = vc.u32 %v816, %v812
      %v819 = vsel %vm818, 1, 0
      %v820 = vadd.s32 %v816, %v812
      %v821 = vadd.s32 %v817, %v819
      %v822 = vadd.s32 %v821, %v811
      %v823 = vadd.s32 %v822, %v813
      %v824 = vshrl.u32 %v823, 3
      %v825 = vmul.u32 %v824, 9
      %v826 = vsub.s32 %v802, %v825
      %v827 = vsub.s32 0, %v826
      %v828 = vsel %vm800, %v827, %v826
      %vm829 = vcmp.lt.s32.totalorder %v652, 0
      %v830 = vsub.s32 0, %v652
      %v831 = vsel %vm829, %v830, %v652
      %v832 = vand.u32 %v831, 65535
      %v833 = vshrl.u32 %v831, 16
      %v835 = vmul.u32 %v832, 14564
      %v836 = vmul.u32 %v832, 58254
      %v837 = vmul.u32 %v833, 14564
      %v838 = vmul.u32 %v833, 58254
      %v839 = vshll.u32 %v836, 16
      %v840 = vshrl.u32 %v836, 16
      %v841 = vshll.u32 %v837, 16
      %v842 = vshrl.u32 %v837, 16
      %vm843 = vc.u32 %v835, %v839
      %v844 = vsel %vm843, 1, 0
      %v845 = vadd.s32 %v835, %v839
      %v846 = vadd.s32 %v838, %v844
      %vm847 = vc.u32 %v845, %v841
      %v848 = vsel %vm847, 1, 0
      %v849 = vadd.s32 %v845, %v841
      %v850 = vadd.s32 %v846, %v848
      %v851 = vadd.s32 %v850, %v840
      %v852 = vadd.s32 %v851, %v842
      %v853 = vshrl.u32 %v852, 3
      %v854 = vmul.u32 %v853, 9
      %v855 = vsub.s32 %v831, %v854
      %v856 = vsub.s32 0, %v855
      %v857 = vsel %vm829, %v856, %v855
      %vm858 = vcmp.lt.s32.totalorder %v653, 0
      %v859 = vsub.s32 0, %v653
      %v860 = vsel %vm858, %v859, %v653
      %v861 = vand.u32 %v860, 65535
      %v862 = vshrl.u32 %v860, 16
      %v864 = vmul.u32 %v861, 14564
      %v865 = vmul.u32 %v861, 58254
      %v866 = vmul.u32 %v862, 14564
      %v867 = vmul.u32 %v862, 58254
      %v868 = vshll.u32 %v865, 16
      %v869 = vshrl.u32 %v865, 16
      %v870 = vshll.u32 %v866, 16
      %v871 = vshrl.u32 %v866, 16
      %vm872 = vc.u32 %v864, %v868
      %v873 = vsel %vm872, 1, 0
      %v874 = vadd.s32 %v864, %v868
      %v875 = vadd.s32 %v867, %v873
      %vm876 = vc.u32 %v874, %v870
      %v877 = vsel %vm876, 1, 0
      %v878 = vadd.s32 %v874, %v870
      %v879 = vadd.s32 %v875, %v877
      %v880 = vadd.s32 %v879, %v869
      %v881 = vadd.s32 %v880, %v871
      %v882 = vshrl.u32 %v881, 3
      %v883 = vmul.u32 %v882, 9
      %v884 = vsub.s32 %v860, %v883
      %v885 = vsub.s32 0, %v884
      %v886 = vsel %vm858, %v885, %v884
      %vm887 = vcmp.lt.s32.totalorder %v654, 0
      %v888 = vsub.s32 0, %v654
      %v889 = vsel %vm887, %v888, %v654
      %v890 = vand.u32 %v889, 65535
      %v891 = vshrl.u32 %v889, 16
      %v893 = vmul.u32 %v890, 14564
      %v894 = vmul.u32 %v890, 58254
      %v895 = vmul.u32 %v891, 14564
      %v896 = vmul.u32 %v891, 58254
      %v897 = vshll.u32 %v894, 16
      %v898 = vshrl.u32 %v894, 16
      %v899 = vshll.u32 %v895, 16
      %v900 = vshrl.u32 %v895, 16
      %vm901 = vc.u32 %v893, %v897
      %v902 = vsel %vm901, 1, 0
      %v903 = vadd.s32 %v893, %v897
      %v904 = vadd.s32 %v896, %v902
      %vm905 = vc.u32 %v903, %v899
      %v906 = vsel %vm905, 1, 0
      %v907 = vadd.s32 %v903, %v899
      %v908 = vadd.s32 %v904, %v906
      %v909 = vadd.s32 %v908, %v898
      %v910 = vadd.s32 %v909, %v900
      %v911 = vshrl.u32 %v910, 3
      %v912 = vmul.u32 %v911, 9
      %v913 = vsub.s32 %v889, %v912
      %v914 = vsub.s32 0, %v913
      %v915 = vsel %vm887, %v914, %v913
      %vm916 = vcmp.ne.s32.totalorder %v683, 0
      %vm917 = vcmp.ne.s32.totalorder %v712, 0
      %vm918 = vcmp.ne.s32.totalorder %v741, 0
      %vm919 = vcmp.ne.s32.totalorder %v770, 0
      %vm920 = vcmp.ne.s32.totalorder %v799, 0
      %vm921 = vcmp.ne.s32.totalorder %v828, 0
      %vm922 = vcmp.ne.s32.totalorder %v857, 0
      %vm923 = vcmp.ne.s32.totalorder %v886, 0
      %vm924 = vcmp.ne.s32.totalorder %v915, 0
      %vm925 = vcmp.lt.s32.totalorder %v683, 0
      %vm926 = vcmp.lt.s32.totalorder %v712, 0
      %vm927 = vcmp.lt.s32.totalorder %v741, 0
      %vm928 = vcmp.lt.s32.totalorder %v770, 0
      %vm929 = vcmp.lt.s32.totalorder %v799, 0
      %vm930 = vcmp.lt.s32.totalorder %v828, 0
      %vm931 = vcmp.lt.s32.totalorder %v857, 0
      %vm932 = vcmp.lt.s32.totalorder %v886, 0
      %vm933 = vcmp.lt.s32.totalorder %v915, 0
      %vm934 = vmand %vm925, %vm916
      %vm935 = vmand %vm926, %vm917
      %vm936 = vmand %vm927, %vm918
      %vm937 = vmand %vm928, %vm919
      %vm938 = vmand %vm929, %vm920
      %vm939 = vmand %vm930, %vm921
      %vm940 = vmand %vm931, %vm922
      %vm941 = vmand %vm932, %vm923
      %vm942 = vmand %vm933, %vm924
      %v943 = vadd.s32 %v683, 9
      %v944 = vadd.s32 %v712, 9
      %v945 = vadd.s32 %v741, 9
      %v946 = vadd.s32 %v770, 9
      %v947 = vadd.s32 %v799, 9
      %v948 = vadd.s32 %v828, 9
      %v949 = vadd.s32 %v857, 9
      %v950 = vadd.s32 %v886, 9
      %v951 = vadd.s32 %v915, 9
      %v952 = vsel %vm934, %v943, %v683
      %v953 = vsel %vm935, %v944, %v712
      %v954 = vsel %vm936, %v945, %v741
      %v955 = vsel %vm937, %v946, %v770
      %v956 = vsel %vm938, %v947, %v799
      %v957 = vsel %vm939, %v948, %v828
      %v958 = vsel %vm940, %v949, %v857
      %v959 = vsel %vm941, %v950, %v886
      %v960 = vsel %vm942, %v951, %v915
      %vm961 = vcmp.eq.s32.totalorder %v952, 8
      %vm962 = vcmp.eq.s32.totalorder %v953, 8
      %vm963 = vcmp.eq.s32.totalorder %v954, 8
      %vm964 = vcmp.eq.s32.totalorder %v955, 8
      %vm965 = vcmp.eq.s32.totalorder %v956, 8
      %vm966 = vcmp.eq.s32.totalorder %v957, 8
      %vm967 = vcmp.eq.s32.totalorder %v958, 8
      %vm968 = vcmp.eq.s32.totalorder %v959, 8
      %vm969 = vcmp.eq.s32.totalorder %v960, 8
      %v970 = vsel %vm961, 1, 0
      %v971 = vsel %vm962, 1, 0
      %v972 = vsel %vm963, 1, 0
      %v973 = vsel %vm964, 1, 0
      %v974 = vsel %vm965, 1, 0
      %v975 = vsel %vm966, 1, 0
      %v976 = vsel %vm967, 1, 0
      %v977 = vsel %vm968, 1, 0
      %v978 = vsel %vm969, 1, 0
      %vm979 = vcmp.eq.s32.totalorder %v970, 1
      %vm980 = vcmp.eq.s32.totalorder %v971, 1
      %vm981 = vcmp.eq.s32.totalorder %v972, 1
      %vm982 = vcmp.eq.s32.totalorder %v973, 1
      %vm983 = vcmp.eq.s32.totalorder %v974, 1
      %vm984 = vcmp.eq.s32.totalorder %v975, 1
      %vm985 = vcmp.eq.s32.totalorder %v976, 1
      %vm986 = vcmp.eq.s32.totalorder %v977, 1
      %vm987 = vcmp.eq.s32.totalorder %v978, 1
      %v988 = vsel %vm979, 0.0, %v627
      %v989 = vsel %vm980, 0.0, %v628
      %v990 = vsel %vm981, 0.0, %v629
      %v991 = vsel %vm982, 0.0, %v630
      %v992 = vsel %vm983, 0.0, %v631
      %v993 = vsel %vm984, 0.0, %v632
      %v994 = vsel %vm985, 0.0, %v633
      %v995 = vsel %vm986, 0.0, %v634
      %v996 = vsel %vm987, 0.0, %v635
      %v997 = vadd.f32 %v988, %v989
      %v998 = vadd.f32 %v997, %v990
      %v999 = vadd.f32 %v998, %v991
      %v1000 = vadd.f32 %v999, %v992
      %v1001 = vadd.f32 %v1000, %v993
      %v1002 = vadd.f32 %v1001, %v994
      %v1003 = vadd.f32 %v1002, %v995
      %v1004 = vadd.f32 %v1003, %v996
      %v1005 = vrot.slane %v1004, 4
      %v1006 = vadd.f32 %v1004, %v1005
      %v1007 = vrot.slane %v1006, 2
      %v1008 = vadd.f32 %v1006, %v1007
      %v1009 = vrot.slane %v1008, 1
      %v1010 = vadd.f32 %v1008, %v1009
      %1011 = vst [vmem:[%s349] sm:$0x1] %v1010
      %v1012 = vmul.f32 %v988, %v988
      %v1013 = vmul.f32 %v989, %v989
      %v1014 = vmul.f32 %v990, %v990
      %v1015 = vmul.f32 %v991, %v991
      %v1016 = vmul.f32 %v992, %v992
      %v1017 = vmul.f32 %v993, %v993
      %v1018 = vmul.f32 %v994, %v994
      %v1019 = vmul.f32 %v995, %v995
      %v1020 = vmul.f32 %v996, %v996
      %v1021 = vadd.f32 %v1012, %v1013
      %v1022 = vadd.f32 %v1021, %v1014
      %v1023 = vadd.f32 %v1022, %v1015
      %v1024 = vadd.f32 %v1023, %v1016
      %v1025 = vadd.f32 %v1024, %v1017
      %v1026 = vadd.f32 %v1025, %v1018
      %v1027 = vadd.f32 %v1026, %v1019
      %v1028 = vadd.f32 %v1027, %v1020
      %v1029 = vrot.slane %v1028, 4
      %v1030 = vadd.f32 %v1028, %v1029
      %v1031 = vrot.slane %v1030, 2
      %v1032 = vadd.f32 %v1030, %v1031
      %v1033 = vrot.slane %v1032, 1
      %v1034 = vadd.f32 %v1032, %v1033
      %1035 = vst [vmem:[%s355] sm:$0x1] %v1034
      %p1036 = scmp.lt.s32.totalorder %s23, 1
      %s1037 = scalar_select %p1036, %s23, 1
      %p1038 = scmp.lt.s32.totalorder %s22, 0
      %s1039 = scalar_select %p1038, %s22, 0
      %s1040 = smul.addr %s1037, 9
      %s1041 = sadd.s32 %s1039, %s1040
      %s1042 = smul.addr %s1041, 8
      %s1043 = scalar_lea.vmem %s4, %s1042
      %p1044 = scmp.lt.s32.totalorder %s23, 1
      %s1045 = scalar_select %p1044, %s23, 1
      %p1046 = scmp.lt.s32.totalorder %s22, 0
      %s1047 = scalar_select %p1046, %s22, 0
      %s1048 = sadd.s32 %s1047, %s1045
      %s1049 = scalar_lea.vmem %s5, %s1048
      %p1050 = scmp.lt.s32.totalorder %s23, 1
      %s1051 = scalar_select %p1050, %s23, 1
      %p1052 = scmp.lt.s32.totalorder %s22, 0
      %s1053 = scalar_select %p1052, %s22, 0
      %s1054 = sadd.s32 %s1053, %s1051
      %s1055 = scalar_lea.vmem %s6, %s1054
      // Predicated region
      $region37: #{unet_down_forward.1} parent=35 // pred_check
        %p1056 = pneg %p154
      $region38: #{unet_down_forward.1} parent=35 // pred_check_branch
        %1058 = sbr.rel (%p1056) target = $region40
      $region39: #{unet_down_forward.1} parent=35 // pred_region
        _
      $region40: #{unet_down_forward.1} parent=35 // pred_fallthru
        _
      // Predicated region
      $region41: #{unet_down_forward.1} parent=35 // pred_check
        %p1059 = pneg %p182
      $region42: #{unet_down_forward.1} parent=35 // pred_check_branch
        %1061 = sbr.rel (%p1059) target = $region44
      $region43: #{unet_down_forward.1} parent=35 // pred_region
        _
      $region44: #{unet_down_forward.1} parent=35 // pred_fallthru
        _
      // Predicated region
      $region45: #{unet_down_forward.1} parent=35 // pred_check
        %p1062 = pneg %p210
      $region46: #{unet_down_forward.1} parent=35 // pred_check_branch
        %1064 = sbr.rel (%p1062) target = $region48
      $region47: #{unet_down_forward.1} parent=35 // pred_region
        _
      $region48: #{unet_down_forward.1} parent=35 // pred_fallthru
        _
    $region36: #{unet_down_forward.1} parent=5 // pred_fallthru
      _
    %p1065 = scmp.le.s32.totalorder 2, %s13
    // Predicated region
    $region49: #{unet_down_forward.1} parent=5 // pred_check
      %p1066 = pneg %p1065
    $region50: #{unet_down_forward.1} parent=5 // pred_check_branch
      %1068 = sbr.rel (%p1066) target = $region52
    $region51: #{unet_down_forward.1} parent=5 // pred_region
      %s1069 = ssub.s32 %s13, 2
      // Predicated region
      $region53: #{unet_down_forward.1} parent=51 // pred_check
        %p1070 = pneg %p160
      $region54: #{unet_down_forward.1} parent=51 // pred_check_branch
        %1072 = sbr.rel (%p1070) target = $region56
      $region55: #{unet_down_forward.1} parent=51 // pred_region
        %p1073 = scmp.lt.s32.totalorder %s25, 1
        %s1074 = scalar_select %p1073, %s25, 1
        %p1075 = scmp.lt.s32.totalorder %s24, 0
        %s1076 = scalar_select %p1075, %s24, 0
        %s1077 = smul.addr %s1074, 9
        %s1078 = sadd.s32 %s1076, %s1077
        %s1079 = smul.addr %s1078, 8
        %s1080 = scalar_lea.vmem %s4, %s1079
      $region56: #{unet_down_forward.1} parent=51 // pred_fallthru
        _
      // Predicated region
      $region57: #{unet_down_forward.1} parent=51 // pred_check
        %p1081 = pneg %p188
      $region58: #{unet_down_forward.1} parent=51 // pred_check_branch
        %1083 = sbr.rel (%p1081) target = $region60
      $region59: #{unet_down_forward.1} parent=51 // pred_region
        %p1084 = scmp.lt.s32.totalorder %s25, 1
        %s1085 = scalar_select %p1084, %s25, 1
        %p1086 = scmp.lt.s32.totalorder %s24, 0
        %s1087 = scalar_select %p1086, %s24, 0
        %s1088 = sadd.s32 %s1087, %s1085
        %s1089 = scalar_lea.vmem %s5, %s1088
      $region60: #{unet_down_forward.1} parent=51 // pred_fallthru
        _
      // Predicated region
      $region61: #{unet_down_forward.1} parent=51 // pred_check
        %p1090 = pneg %p216
      $region62: #{unet_down_forward.1} parent=51 // pred_check_branch
        %1092 = sbr.rel (%p1090) target = $region64
      $region63: #{unet_down_forward.1} parent=51 // pred_region
        %p1093 = scmp.lt.s32.totalorder %s25, 1
        %s1094 = scalar_select %p1093, %s25, 1
        %p1095 = scmp.lt.s32.totalorder %s24, 0
        %s1096 = scalar_select %p1095, %s24, 0
        %s1097 = sadd.s32 %s1096, %s1094
        %s1098 = scalar_lea.vmem %s6, %s1097
      $region64: #{unet_down_forward.1} parent=51 // pred_fallthru
        _
    $region52: #{unet_down_forward.1} parent=5 // pred_fallthru
      _
  $region6: #{unet_down_forward.1} parent=0 // loop_footer
    %s17 = sadd.s32 1, %s13
  $region7: #{unet_down_forward.1} parent=0 // loop_footer_branch
    %12 = sbr.rel target = $region3
  $region8: #{unet_down_forward.1} parent=0 // loop_exit
    _

</llo_original>
